<compile_context>
chip_gen: v6e
topology: v6e:2x2x1
jax: 0.10.0
libtpu: 0.0.40
codegen_flags: <defaults>
</compile_context>

<pallas_src>
import math

import jax
import jax.numpy as jnp
from jax.experimental import pallas as pl
from jax.experimental.pallas import tpu as pltpu


def _build_pe_table(embed_dim: int, max_len: int = 100) -> jnp.ndarray:
    """Deterministic sin/cos table, identical to the PyTorch __init__."""
    position = jnp.arange(0, max_len, dtype=jnp.float32)[:, None]            # (max_len, 1)
    div_term = jnp.exp(
        jnp.arange(0, embed_dim, 2, dtype=jnp.float32)
        * -(math.log(10000.0) / embed_dim)
    )                                                                        # (embed_dim//2,)
    pe = jnp.zeros((max_len, embed_dim), dtype=jnp.float32)
    pe = pe.at[:, 0::2].set(jnp.sin(position * div_term))
    pe = pe.at[:, 1::2].set(jnp.cos(position * div_term))
    return pe                                                                # (max_len, embed_dim)


def _choose_tblk(T: int, row_bytes: int, target_bytes: int) -> int:
    """Rows of T per output slab, targeting ~target_bytes per block."""
    tblk = max(1, target_bytes // max(1, row_bytes))
    if tblk >= T:
        return T                       # full extent -> always a legal block dim
    return min(T, max(8, (tblk // 8) * 8))   # sublane-aligned otherwise


def positional_encoding_forward(
    x: jnp.ndarray, pe: jnp.ndarray, *, target_block_bytes: int = 2 << 20
) -> jnp.ndarray:
    """out[b, t, s, d] = pe[t, d], broadcast to x.shape via a Pallas kernel."""
    B, T, S, D = x.shape
    assert pe.shape[1] == D
    assert T <= pe.shape[0]
    out_dtype = x.dtype

    itemsize = jnp.dtype(out_dtype).itemsize
    tblk = _choose_tblk(T, B * S * D * itemsize, target_block_bytes)
    n_blocks = pl.cdiv(T, tblk)

    # Keep PE reads in-bounds if tblk does not divide T (tiny wrapper-side pad).
    pe_use = pe[:T]
    if n_blocks * tblk > T:
        pe_use = jnp.pad(pe_use, ((0, n_blocks * tblk - T), (0, 0)))

    def kernel(pe_ref, o_ref):
        # pe_ref: (tblk, D) block of the PE table for this T-range.
        # o_ref : (B, tblk, S*D) lane-dense output slab.
        rows = pe_ref[...].astype(o_ref.dtype)        # (tblk, D)
        lane = jnp.tile(rows, (1, S))                 # (tblk, S*D): [t, s*D+d] = pe[t, d]
        o_ref[...] = jnp.broadcast_to(lane[None, :, :], o_ref.shape)

    out_flat = pl.pallas_call(
        kernel,
        out_shape=jax.ShapeDtypeStruct((B, T, S * D), out_dtype),
        grid_spec=pltpu.PrefetchScalarGridSpec(
            num_scalar_prefetch=0,
            grid=(n_blocks,),
            in_specs=[
                pl.BlockSpec((tblk, D), lambda t: (t, 0)),
            ],
            out_specs=pl.BlockSpec((B, tblk, S * D), lambda t: (0, t, 0)),
        ),
        compiler_params=pltpu.CompilerParams(
            dimension_semantics=("parallel",),
        ),
    )(pe_use)

    # Free (contiguous, row-major) reshape back to the module's layout.
    return out_flat.reshape(B, T, S, D)


if __name__ == "__main__":
    # Small shapes consistent with the forward: x is (B, T, S, D), D = embed_dim.
    B, T, S, D = 2, 8, 4, 32
    max_len = 100

    key = jax.random.PRNGKey(0)
    x = jax.random.normal(key, (B, T, S, D), dtype=jnp.float32)

    pe = _build_pe_table(D, max_len)                  # (max_len, D), deterministic

    out = positional_encoding_forward(x, pe)
    out = jax.block_until_ready(out)

    # Reference (pure JAX, mirrors the PyTorch forward).
    ref = jnp.broadcast_to(pe[:T][None, :, None, :], (B, T, S, D)).astype(x.dtype)
    assert out.shape == x.shape
    assert out.dtype == x.dtype
    assert jnp.allclose(out, ref, atol=0.0, rtol=0.0), "mismatch vs reference"

    print("KERNEL_OK")
</pallas_src>

<mosaic_0001>
module attributes {stable_mosaic.version = 11 : i64} {
  func.func @kernel(%arg0: i32, %arg1: memref<8x32xf32, #tpu.memory_space<vmem>>, %arg2: memref<2x8x128xf32, #tpu.memory_space<vmem>>) attributes {dimension_semantics = [#tpu.dimension_semantics<parallel>], iteration_bounds = array<i64: 1>, scalar_prefetch = 0 : i64, scratch_operands = 0 : i64, tpu.core_type = #tpu.core_type<tc>, window_params = [{transform_indices = @transform_0, window_bounds = array<i64: 8, 32>}, {transform_indices = @transform_1, window_bounds = array<i64: 2, 8, 128>}]} {
    %c0 = arith.constant 0 : index
    %c0_0 = arith.constant 0 : index
    %0 = vector.load %arg1[%c0, %c0_0] : memref<8x32xf32, #tpu.memory_space<vmem>>, vector<8x32xf32>
    %1 = tpu.concatenate %0, %0, %0, %0 in 1 : vector<8x32xf32>, vector<8x32xf32>, vector<8x32xf32>, vector<8x32xf32> -> vector<8x128xf32>
    %2 = vector.shape_cast %1 : vector<8x128xf32> to vector<1x8x128xf32>
    %3 = vector.shape_cast %2 : vector<1x8x128xf32> to vector<1x8x128xf32>
    %4 = vector.broadcast %3 : vector<1x8x128xf32> to vector<2x8x128xf32>
    %c0_1 = arith.constant 0 : index
    %c0_2 = arith.constant 0 : index
    %c0_3 = arith.constant 0 : index
    %5 = vector.load %arg2[%c0_1, %c0_2, %c0_3] : memref<2x8x128xf32, #tpu.memory_space<vmem>>, vector<2x8x128xf32>
    tpu.vector_store %arg2[%c0_1, %c0_2, %c0_3], %4 {strides = array<i32>} : memref<2x8x128xf32, #tpu.memory_space<vmem>>, vector<2x8x128xf32>,
    return
  }
  func.func @transform_0(%arg0: i32) -> (i32, i32) {
    %c0_i32 = arith.constant 0 : i32
    %c0_i32_0 = arith.constant 0 : i32
    return %arg0, %c0_i32 : i32, i32
  }
  func.func @transform_1(%arg0: i32) -> (i32, i32, i32) {
    %c0_i32 = arith.constant 0 : i32
    %c0_i32_0 = arith.constant 0 : i32
    %c0_i32_1 = arith.constant 0 : i32
    return %c0_i32, %arg0, %c0_i32_0 : i32, i32, i32
  }
}

</mosaic_0001>

<llo_original>
// kernel: tpu_custom_call.1
$region0: #{tpu_custom_call.1}
  #allocation0 [shape = 'u32[]', space=smem, size = 0x4, offset = 0x4, fixed_abs, tag = 'smem constant byte address 0x4 - core index']
  #allocation1 [shape = 'u32[144,128]{1,0:T(1,128)}', space=vmem, size = 0x12000, scoped, tag = 'internal scratch']
  %s0 = inlined_call_operand.hbm [shape: f32[8,32], index: 0, kind: input, shape index: {}]
  %s1 = inlined_call_operand.hbm [shape: f32[2,8,128], index: 1, kind: output, shape index: {}]
  %s2 = sld [smem:[#allocation0]]
  $region18: #{tpu_custom_call.1} parent=0
    _
  %s4 = ssub.s32 1, %s2
  %s5 = scalar_select 0, %s4, %s2
  $region1: #{tpu_custom_call.1} parent=0
    #allocation2 [shape = 'u8[4096]{0}', space=vmem, size = 0x1000, scoped, tag = 'input window, operand 0, single buffered']
    #allocation3 [shape = 's32[1]{0}', space=sflag, size = 0x4, scoped, tag = 'scoped memory for tpu_custom_call.1']
    #allocation4 [shape = 's32[1]{0}', space=sflag, size = 0x4, scoped, tag = 'scoped memory for tpu_custom_call.1']
    #allocation5 [shape = 'u8[8192]{0}', space=vmem, size = 0x2000, scoped, tag = 'output window, operand 0, single buffered']
    %6 = vsyncpa [#allocation3], 0
    %7 = vsyncpa [#allocation4], 0
    // Predicated region
    $region2: #{tpu_custom_call.1} parent=1 // pred_check
      _
    $region3: #{tpu_custom_call.1} parent=1 // pred_check_branch
      %9 = sbr.rel (0) target = $region5
    $region4: #{tpu_custom_call.1} parent=1 // pred_region
      %s11 = ssub.s32 128, 128
      %12 = vsyncadd [#allocation3], %s11
      %s14 = sshll.u32 [#allocation2], 4
      %s15 = int_to_ptr.vmem [resolvable:$true] %s14
      %17 = dma.hbm_to_vmem [thread:$0]  %s0, 128, %s15, [#allocation3]
    $region5: #{tpu_custom_call.1} parent=1 // pred_fallthru
      _
    // Predicated region
    $region6: #{tpu_custom_call.1} parent=1 // pred_check
      _
    $region7: #{tpu_custom_call.1} parent=1 // pred_check_branch
      %19 = sbr.rel (0) target = $region9
    $region8: #{tpu_custom_call.1} parent=1 // pred_region
      %20 = dma.done [#allocation3], 128
    $region9: #{tpu_custom_call.1} parent=1 // pred_fallthru
      _
    %v21 = vld [vmem:[#allocation2] sm:$0xff]
    %23 = vrot.lane.b32.xlu0 %v21, 32
    %v24 = vpop.permute.xlu0 %23
    %26 = vrot.lane.b32.xlu0 %v21, 64
    %v27 = vpop.permute.xlu0 %26
    %29 = vrot.lane.b32.xlu0 %v21, 96
    %v30 = vpop.permute.xlu0 %29
    %vm32 = vcmask 261120
    %v33 = vsel %vm32, %v21, %v24
    %vm34 = vcmask 523264
    %v35 = vsel %vm34, %v33, %v27
    %vm36 = vcmask 785408
    %v37 = vsel %vm36, %v35, %v30
    %38 = vst [vmem:[#allocation5] sm:$0xff] %v37
    %39 = vst [vmem:[#allocation5 + $0x8] sm:$0xff] %v37
    // Predicated region
    $region10: #{tpu_custom_call.1} parent=1 // pred_check
      _
    $region11: #{tpu_custom_call.1} parent=1 // pred_check_branch
      %41 = sbr.rel (0) target = $region13
    $region12: #{tpu_custom_call.1} parent=1 // pred_region
      %s43 = ssub.s32 256, 256
      %44 = vsyncadd [#allocation4], %s43
      %s45 = sshll.u32 [#allocation5], 4
      %s46 = int_to_ptr.vmem [resolvable:$true] %s45
      %51 = dma.vmem_to_hbm [thread:$0]  %s46, 256, %s1, [#allocation4], 128, 128, 8
    $region13: #{tpu_custom_call.1} parent=1 // pred_fallthru
      _
    // Predicated region
    $region14: #{tpu_custom_call.1} parent=1 // pred_check
      _
    $region15: #{tpu_custom_call.1} parent=1 // pred_check_branch
      %53 = sbr.rel (0) target = $region17
    $region16: #{tpu_custom_call.1} parent=1 // pred_region
      %54 = dma.done [#allocation4], 256
    $region17: #{tpu_custom_call.1} parent=1 // pred_fallthru
      _
    %55 = vsyncpa [#allocation3], 1
    %56 = vsyncpa [#allocation4], 1

</llo_original>
